<compile_context>
chip_gen: v5e
topology: v5e:2x2
jax: 0.10.0
libtpu: 0.0.40
codegen_flags: <defaults>
</compile_context>

<pallas_src>
from functools import partial

import jax
import jax.numpy as jnp
from jax import lax
from jax.experimental import pallas as pl
from jax.experimental.pallas import tpu as pltpu

BN_EPS = 1e-5
NEG_SLOPE = 0.2

_VMEM_LIMIT_BYTES = 48 * 1024 * 1024       # safe on v7x (64 MiB physical / TC)
_TILE_VMEM_BUDGET = 24 * 1024 * 1024       # per-pallas_call working-set target
_SINGLE_PASS_BUDGET = 40 * 1024 * 1024     # whole-y-resident-in-VMEM threshold
_MAX_RESIDENT_STATS_BYTES = 2 * 1024 * 1024


def _round_up(a, b):
    return (a + b - 1) // b * b


# ------------------------------ im2col (XLA) ----------------------------------

def _im2col_bf16(x, kh=4, kw=4, stride=2, pad=1):
    # x: [N, C, H, W] f32 -> bf16 patches [N*Ho*Wo, C*kh*kw], rows ordered
    # (n, h_out, w_out), patch flattened as (c_in, kh, kw) to match OIHW weights.
    n, c, h, w = x.shape
    h_out = (h + 2 * pad - kh) // stride + 1
    w_out = (w + 2 * pad - kw) // stride + 1
    xb = x.astype(jnp.bfloat16)
    xp = jnp.pad(xb, ((0, 0), (0, 0), (pad, pad), (pad, pad)))
    cols = []
    for i in range(kh):
        for j in range(kw):
            cols.append(
                xp[:, :, i:i + stride * h_out:stride, j:j + stride * w_out:stride])
    patches = jnp.stack(cols, axis=0).transpose(1, 3, 4, 2, 0)  # [N,Ho,Wo,C,kh*kw]
    return patches.reshape(n * h_out * w_out, c * kh * kw), h_out, w_out


# ------------- Two-pass path, phase 1: matmul + per-tile channel stats --------

def _matmul_stats_kernel(p_ref, w_ref, y_ref, sum_ref, sumsq_ref):
    # p_ref: [TM, K] bf16 patches (one M tile); w_ref: [K, NP] bf16 (resident).
    y = jnp.dot(p_ref[...], w_ref[...], preferred_element_type=jnp.float32)
    # Stats come from the f32 MXU result; y is down-cast to bf16 only for the
    # HBM round trip (halves the dominant memory stream).
    y_ref[...] = y.astype(jnp.bfloat16)
    rows = lax.broadcasted_iota(jnp.int32, sum_ref.shape, 0)       # [8, NP]
    sum_ref[...] = jnp.where(rows == 0,
                             jnp.sum(y, axis=0, keepdims=True), 0.0)
    sumsq_ref[...] = jnp.where(rows == 0,
                               jnp.sum(y * y, axis=0, keepdims=True), 0.0)


# ------------- Two-pass path, phase 2: fused BN fold + affine + LeakyReLU -----

def _make_bn_lrelu_kernel(inv_m):
    def kernel(y_ref, sum_ref, sumsq_ref, g_ref, b_ref, o_ref):
        # Combine per-tile partial sums and build scale/shift in-kernel.
        # Recomputed per tile (tiny) so the M axis stays "parallel".
        mean = jnp.sum(sum_ref[...], axis=0, keepdims=True) * inv_m     # [1,NP]
        ex2 = jnp.sum(sumsq_ref[...], axis=0, keepdims=True) * inv_m
        var = jnp.maximum(ex2 - mean * mean, 0.0)
        scale = g_ref[...] * lax.rsqrt(var + BN_EPS)
        shift = b_ref[...] - mean * scale
        z = y_ref[...].astype(jnp.float32) * scale + shift
        o_ref[...] = jnp.where(z >= 0.0, z, NEG_SLOPE * z)
    return kernel


def _choose_two_pass_tiles(m, k, np_):
    # Phase-1 M tile: double-buffered bf16 patches + bf16 y + resident weight.
    tm = 16
    for cand in (1024, 512, 256, 128, 64, 32, 16):
        need = (2 * cand * k * 2        # patches (double-buffered, bf16)
                + 2 * k * np_ * 2       # weight (worst case 2 buffers, bf16)
                + 2 * cand * np_ * 2    # y out (double-buffered, bf16)
                + 4 * 8 * np_ * 4)      # per-tile stats outputs
        if need <= _TILE_VMEM_BUDGET:
            tm = cand
            break
    # Keep >= 2 M tiles when possible so "parallel" shards over both v7x TCs.
    tm = min(tm, _round_up(max((m + 1) // 2, 16), 16))
    m_pad1 = _round_up(m, tm)
    nt1 = m_pad1 // tm
    stats_rows = nt1 * 8 if nt1 * 8 * np_ * 4 <= _MAX_RESIDENT_STATS_BYTES else 1
    # Phase-2 tile (pure elementwise, mem-bound): go bigger, multiple of tm.
    tm2 = tm
    for f in (8, 4, 2):
        cand = tm * f
        if cand > 2048 or cand > m_pad1:
            continue
        need = (2 * cand * np_ * 2             # y in (bf16, double-buffered)
                + 2 * cand * np_ * 4           # out (f32, double-buffered)
                + 4 * stats_rows * np_ * 4     # resident stats (2 arrays)
                + 4 * np_ * 4)                 # gamma / beta
        if need <= _TILE_VMEM_BUDGET:
            tm2 = cand
            break
    m_pad = _round_up(m_pad1, tm2)             # multiple of both tm and tm2
    return tm, tm2, m_pad


def _two_pass_call(patches, w_mat, gamma_p, beta_p, m_true, tm, tm2, np_):
    m_pad, k = patches.shape
    nt1 = m_pad // tm
    nt2 = m_pad // tm2

    y_flat, sums, sumsqs = pl.pallas_call(
        _matmul_stats_kernel,
        out_shape=(jax.ShapeDtypeStruct((m_pad, np_), jnp.bfloat16),
                   jax.ShapeDtypeStruct((nt1 * 8, np_), jnp.float32),
                   jax.ShapeDtypeStruct((nt1 * 8, np_), jnp.float32)),
        grid_spec=pltpu.PrefetchScalarGridSpec(
            num_scalar_prefetch=0,
            grid=(nt1,),
            in_specs=[pl.BlockSpec((tm, k), lambda i: (i, 0)),      # streamed
                      pl.BlockSpec((k, np_), lambda i: (0, 0))],    # resident
            out_specs=(pl.BlockSpec((tm, np_), lambda i: (i, 0)),   # y (bf16)
                       pl.BlockSpec((8, np_), lambda i: (i, 0)),    # partial sum
                       pl.BlockSpec((8, np_), lambda i: (i, 0)))),  # partial sum^2
        compiler_params=pltpu.CompilerParams(
            dimension_semantics=("parallel",),
            vmem_limit_bytes=_VMEM_LIMIT_BYTES),
    )(patches, w_mat)

    # Normally the per-tile partials go straight into the second kernel (the
    # whole BN fold lives in-kernel).  Only for very large grids do we pre-reduce
    # them host-side so the resident stats block stays small.
    if nt1 * 8 * np_ * 4 > _MAX_RESIDENT_STATS_BYTES:
        sums = jnp.sum(sums, axis=0, keepdims=True)
        sumsqs = jnp.sum(sumsqs, axis=0, keepdims=True)
    stats_rows = sums.shape[0]

    out_flat = pl.pallas_call(
        _make_bn_lrelu_kernel(1.0 / float(m_true)),
        out_shape=jax.ShapeDtypeStruct((m_pad, np_), jnp.float32),
        grid_spec=pltpu.PrefetchScalarGridSpec(
            num_scalar_prefetch=0,
            grid=(nt2,),
            in_specs=[
                pl.BlockSpec((tm2, np_), lambda i: (i, 0)),          # y (bf16)
                pl.BlockSpec((stats_rows, np_), lambda i: (0, 0)),   # resident
                pl.BlockSpec((stats_rows, np_), lambda i: (0, 0)),   # resident
                pl.BlockSpec((1, np_), lambda i: (0, 0)),            # gamma
                pl.BlockSpec((1, np_), lambda i: (0, 0)),            # beta
            ],
            out_specs=pl.BlockSpec((tm2, np_), lambda i: (i, 0))),
        compiler_params=pltpu.CompilerParams(
            dimension_semantics=("parallel",),
            vmem_limit_bytes=_VMEM_LIMIT_BYTES),
    )(y_flat, sums, sumsqs, gamma_p, beta_p)
    return out_flat


# -------- Single-pass path: bf16 y stays resident in VMEM (no HBM round trip) --

def _single_pass_call(patches, w_mat, gamma_p, beta_p, m_true, tm, np_):
    m_pad, k = patches.shape
    nt = m_pad // tm
    inv_m = 1.0 / float(m_true)

    def kernel(p_ref, w_ref, g_ref, b_ref, o_ref, y_vmem, s_ref, ss_ref):
        ph = pl.program_id(0)
        i = pl.program_id(1)

        @pl.when(ph == 0)
        def _compute():
            @pl.when(i == 0)
            def _init():
                s_ref[...] = jnp.zeros_like(s_ref)
                ss_ref[...] = jnp.zeros_like(ss_ref)
            y = jnp.dot(p_ref[...], w_ref[...],
                        preferred_element_type=jnp.float32)
            s_ref[...] += jnp.sum(y, axis=0, keepdims=True)
            ss_ref[...] += jnp.sum(y * y, axis=0, keepdims=True)
            y_vmem[i] = y.astype(jnp.bfloat16)

        @pl.when(ph == 1)
        def _normalize():
            mean = s_ref[...] * inv_m
            var = jnp.maximum(ss_ref[...] * inv_m - mean * mean, 0.0)
            scale = g_ref[...] * lax.rsqrt(var + BN_EPS)
            shift = b_ref[...] - mean * scale
            z = y_vmem[i].astype(jnp.float32) * scale + shift
            o_ref[...] = jnp.where(z >= 0.0, z, NEG_SLOPE * z)

    return pl.pallas_call(
        kernel,
        out_shape=jax.ShapeDtypeStruct((m_pad, np_), jnp.float32),
        grid_spec=pltpu.PrefetchScalarGridSpec(
            num_scalar_prefetch=0,
            grid=(2, nt),
            in_specs=[
                # Phase 0 streams tile i; phase 1 pins the already-resident last
                # tile so no patch DMAs happen while normalizing.
                pl.BlockSpec((tm, k), lambda ph, i: (i + ph * (nt - 1 - i), 0)),
                pl.BlockSpec((k, np_), lambda ph, i: (0, 0)),
                pl.BlockSpec((1, np_), lambda ph, i: (0, 0)),
                pl.BlockSpec((1, np_), lambda ph, i: (0, 0)),
            ],
            # Block index is constant (0) through phase 0, then i in phase 1:
            # every output block is written to HBM exactly once, post-BN.
            out_specs=pl.BlockSpec((tm, np_), lambda ph, i: (i * ph, 0)),
            scratch_shapes=[
                pltpu.VMEM((nt, tm, np_), jnp.bfloat16),   # resident bf16 y
                pltpu.VMEM((1, np_), jnp.float32),         # channel sum
                pltpu.VMEM((1, np_), jnp.float32),         # channel sum of squares
            ]),
        compiler_params=pltpu.CompilerParams(
            dimension_semantics=("arbitrary", "arbitrary"),
            vmem_limit_bytes=_VMEM_LIMIT_BYTES),
    )(patches, w_mat, gamma_p, beta_p)


# ----------------------------------- wrapper ----------------------------------

@partial(jax.jit, static_argnames=("path",))
def dcgan_conv_forward(x, weight, bias, gamma, beta, path="auto"):
    """Conv2d(4, stride 2, pad 1) -> BatchNorm2d (batch stats) -> LeakyReLU(0.2)."""
    del bias  # Conv2d bias before training-mode BatchNorm cancels exactly.
    n = x.shape[0]
    nout = weight.shape[0]

    # TODO(synk): fuse the im2col into the Pallas input pipeline (stream NHWC row
    # bands and accumulate 16 shifted matmuls) to avoid materializing patches.
    patches, h_out, w_out = _im2col_bf16(x)
    m, k = patches.shape
    np_ = _round_up(nout, 128)                   # lane-align output channels

    w_mat = weight.reshape(nout, k).T.astype(jnp.bfloat16)        # [K, nout]
    w_mat = jnp.pad(w_mat, ((0, 0), (0, np_ - nout)))             # [K, NP]
    gamma_p = jnp.pad(gamma.astype(jnp.float32), (0, np_ - nout)).reshape(1, np_)
    beta_p = jnp.pad(beta.astype(jnp.float32), (0, np_ - nout)).reshape(1, np_)

    # Single-pass (y resident in VMEM) if it fits a cross-generation budget.
    tm_sp = min(512, _round_up(m, 16))
    m_pad_sp = _round_up(m, tm_sp)
    sp_need = (m_pad_sp * np_ * 2          # resident bf16 y scratch
               + 2 * tm_sp * k * 2         # double-buffered patches
               + 2 * k * np_ * 2           # weight
               + 2 * tm_sp * np_ * 4       # double-buffered f32 output
               + 8 * np_ * 4 + (1 << 20))  # stats/gamma/beta + headroom
    use_single = path == "single" or (path == "auto"
                                      and sp_need <= _SINGLE_PASS_BUDGET)

    if use_single:
        # Zero-padded tail rows / channels contribute exactly 0 to the stats.
        patches_p = jnp.pad(patches, ((0, m_pad_sp - m), (0, 0)))
        out_flat = _single_pass_call(patches_p, w_mat, gamma_p, beta_p,
                                     m, tm_sp, np_)
    else:
        tm, tm2, m_pad = _choose_two_pass_tiles(m, k, np_)
        patches_p = jnp.pad(patches, ((0, m_pad - m), (0, 0)))
        out_flat = _two_pass_call(patches_p, w_mat, gamma_p, beta_p,
                                  m, tm, tm2, np_)

    out = out_flat[:m, :nout].reshape(n, h_out, w_out, nout)
    # TODO(synk): consumers that accept NHWC should skip this transpose (a full
    # extra HBM round trip of the output); kept here for NCHW module semantics.
    return out.transpose(0, 3, 1, 2)             # -> NCHW


# ---------------------------------- reference ----------------------------------

def _reference(x, weight, bias, gamma, beta):
    y = lax.conv_general_dilated(
        x, weight, window_strides=(2, 2), padding=((1, 1), (1, 1)),
        dimension_numbers=("NCHW", "OIHW", "NCHW"))
    y = y + bias.reshape(1, -1, 1, 1)
    mean = jnp.mean(y, axis=(0, 2, 3), keepdims=True)
    var = jnp.mean((y - mean) ** 2, axis=(0, 2, 3), keepdims=True)
    y = (y - mean) * lax.rsqrt(var + BN_EPS)
    y = y * gamma.reshape(1, -1, 1, 1) + beta.reshape(1, -1, 1, 1)
    return jnp.where(y >= 0, y, NEG_SLOPE * y)


if __name__ == "__main__":
    key = jax.random.PRNGKey(0)
    n, nin, nout, h, w = 2, 4, 8, 16, 16

    kx, kw_, kb, kg, kbe = jax.random.split(key, 5)
    x = jax.random.normal(kx, (n, nin, h, w), dtype=jnp.float32)
    weight = jax.random.normal(kw_, (nout, nin, 4, 4), dtype=jnp.float32) * 0.1
    bias = jax.random.normal(kb, (nout,), dtype=jnp.float32) * 0.1
    gamma = 1.0 + 0.1 * jax.random.normal(kg, (nout,), dtype=jnp.float32)
    beta = 0.1 * jax.random.normal(kbe, (nout,), dtype=jnp.float32)

    ref = _reference(x, weight, bias, gamma, beta)

    # Auto path (y fits in VMEM at this size -> fused single-pass kernel).
    out = dcgan_conv_forward(x, weight, bias, gamma, beta)
    jax.block_until_ready(out)
    assert out.shape == (n, nout, h // 2, w // 2)
    # bf16 patch/weight streaming + bf16 intermediate y -> bf16-level tolerance
    # (post-BN values are O(1)).
    assert jnp.allclose(out, ref, atol=3e-2, rtol=3e-2), (
        float(jnp.max(jnp.abs(out - ref))))

    # Also exercise the tiled two-pass path (used when y does not fit in VMEM).
    out2 = dcgan_conv_forward(x, weight, bias, gamma, beta, path="two_pass")
    jax.block_until_ready(out2)
    assert out2.shape == (n, nout, h // 2, w // 2)
    assert jnp.allclose(out2, ref, atol=3e-2, rtol=3e-2), (
        float(jnp.max(jnp.abs(out2 - ref))))

    print("KERNEL_OK")
</pallas_src>

<mosaic_0001>
module attributes {stable_mosaic.version = 11 : i64} {
  func.func @kernel(%arg0: i32, %arg1: i32, %arg2: memref<128x64xbf16, #tpu.memory_space<vmem>>, %arg3: memref<64x128xbf16, #tpu.memory_space<vmem>>, %arg4: memref<1x128xf32, #tpu.memory_space<vmem>>, %arg5: memref<1x128xf32, #tpu.memory_space<vmem>>, %arg6: memref<128x128xf32, #tpu.memory_space<vmem>>, %arg7: memref<1x128x128xbf16, #tpu.memory_space<vmem>>, %arg8: memref<1x128xf32, #tpu.memory_space<vmem>>, %arg9: memref<1x128xf32, #tpu.memory_space<vmem>>) attributes {dimension_semantics = [#tpu.dimension_semantics<arbitrary>, #tpu.dimension_semantics<arbitrary>], iteration_bounds = array<i64: 2, 1>, scalar_prefetch = 0 : i64, scratch_operands = 3 : i64, tpu.core_type = #tpu.core_type<tc>, window_params = [{transform_indices = @transform_0, window_bounds = array<i64: 128, 64>}, {pipeline_mode = #tpu.pipeline_mode<synchronous>, transform_indices = @transform_1, window_bounds = array<i64: 64, 128>}, {pipeline_mode = #tpu.pipeline_mode<synchronous>, transform_indices = @transform_2, window_bounds = array<i64: 1, 128>}, {pipeline_mode = #tpu.pipeline_mode<synchronous>, transform_indices = @transform_3, window_bounds = array<i64: 1, 128>}, {transform_indices = @transform_4, window_bounds = array<i64: 128, 128>}]} {
    %c0_i32 = arith.constant 0 : i32
    %0 = arith.cmpi eq, %arg0, %c0_i32 : i32
    %1 = arith.extui %0 : i1 to i32
    %c0_i32_0 = arith.constant 0 : i32
    %2 = arith.cmpi ne, %1, %c0_i32_0 : i32
    scf.if %2 {
      %c0_i32_2 = arith.constant 0 : i32
      %6 = arith.cmpi eq, %arg1, %c0_i32_2 : i32
      %7 = arith.extui %6 : i1 to i32
      %c0_i32_3 = arith.constant 0 : i32
      %8 = arith.cmpi ne, %7, %c0_i32_3 : i32
      scf.if %8 {
        %cst_19 = arith.constant 0.000000e+00 : f32
        %28 = vector.broadcast %cst_19 : f32 to vector<1x128xf32>
        %c0_20 = arith.constant 0 : index
        %c0_21 = arith.constant 0 : index
        %29 = vector.load %arg8[%c0_20, %c0_21] : memref<1x128xf32, #tpu.memory_space<vmem>>, vector<1x128xf32>
        tpu.vector_store %arg8[%c0_20, %c0_21], %28 {strides = array<i32>} : memref<1x128xf32, #tpu.memory_space<vmem>>, vector<1x128xf32>,
        %cst_22 = arith.constant 0.000000e+00 : f32
        %30 = vector.broadcast %cst_22 : f32 to vector<1x128xf32>
        %c0_23 = arith.constant 0 : index
        %c0_24 = arith.constant 0 : index
        %31 = vector.load %arg9[%c0_23, %c0_24] : memref<1x128xf32, #tpu.memory_space<vmem>>, vector<1x128xf32>
        tpu.vector_store %arg9[%c0_23, %c0_24], %30 {strides = array<i32>} : memref<1x128xf32, #tpu.memory_space<vmem>>, vector<1x128xf32>,
      } else {
      }
      %c0 = arith.constant 0 : index
      %c0_4 = arith.constant 0 : index
      %9 = vector.load %arg2[%c0, %c0_4] : memref<128x64xbf16, #tpu.memory_space<vmem>>, vector<128x64xbf16>
      %c0_5 = arith.constant 0 : index
      %c0_6 = arith.constant 0 : index
      %10 = vector.load %arg3[%c0_5, %c0_6] : memref<64x128xbf16, #tpu.memory_space<vmem>>, vector<64x128xbf16>
      %cst = arith.constant dense<0.000000e+00> : vector<128x128xf32>
      %11 = tpu.matmul %9, %10, %cst {dimension_numbers = #tpu.dot_dimension_numbers<[1], [0], [0], [1], [0, 0, 1, 1], [], []>} : vector<128x64xbf16>, vector<64x128xbf16>, vector<128x128xf32> -> vector<128x128xf32>
      %c0_7 = arith.constant 0 : index
      %c0_8 = arith.constant 0 : index
      %12 = vector.load %arg8[%c0_7, %c0_8] : memref<1x128xf32, #tpu.memory_space<vmem>>, vector<1x128xf32>
      %cst_9 = arith.constant dense<0.000000e+00> : vector<128xf32>
      %13 = vector.multi_reduction <add>, %11, %cst_9 [0] : vector<128x128xf32> to vector<128xf32>
      %14 = vector.shape_cast %13 : vector<128xf32> to vector<1x128xf32>
      %15 = arith.addf %12, %14 : vector<1x128xf32>
      %c0_10 = arith.constant 0 : index
      %c0_11 = arith.constant 0 : index
      %16 = vector.load %arg8[%c0_10, %c0_11] : memref<1x128xf32, #tpu.memory_space<vmem>>, vector<1x128xf32>
      tpu.vector_store %arg8[%c0_10, %c0_11], %15 {strides = array<i32>} : memref<1x128xf32, #tpu.memory_space<vmem>>, vector<1x128xf32>,
      %c0_12 = arith.constant 0 : index
      %c0_13 = arith.constant 0 : index
      %17 = vector.load %arg9[%c0_12, %c0_13] : memref<1x128xf32, #tpu.memory_space<vmem>>, vector<1x128xf32>
      %18 = arith.mulf %11, %11 : vector<128x128xf32>
      %cst_14 = arith.constant dense<0.000000e+00> : vector<128xf32>
      %19 = vector.multi_reduction <add>, %18, %cst_14 [0] : vector<128x128xf32> to vector<128xf32>
      %20 = vector.shape_cast %19 : vector<128xf32> to vector<1x128xf32>
      %21 = arith.addf %17, %20 : vector<1x128xf32>
      %c0_15 = arith.constant 0 : index
      %c0_16 = arith.constant 0 : index
      %22 = vector.load %arg9[%c0_15, %c0_16] : memref<1x128xf32, #tpu.memory_space<vmem>>, vector<1x128xf32>
      tpu.vector_store %arg9[%c0_15, %c0_16], %21 {strides = array<i32>} : memref<1x128xf32, #tpu.memory_space<vmem>>, vector<1x128xf32>,
      %23 = arith.truncf %11 : vector<128x128xf32> to vector<128x128xbf16>
      %24 = arith.index_cast %arg1 : i32 to index
      %c0_17 = arith.constant 0 : index
      %c0_18 = arith.constant 0 : index
      %25 = vector.load %arg7[%24, %c0_17, %c0_18] : memref<1x128x128xbf16, #tpu.memory_space<vmem>>, vector<1x128x128xbf16>
      %26 = vector.shape_cast %25 : vector<1x128x128xbf16> to vector<128x128xbf16>
      %27 = vector.shape_cast %23 : vector<128x128xbf16> to vector<1x128x128xbf16>
      tpu.vector_store %arg7[%24, %c0_17, %c0_18], %27 {strides = array<i32>} : memref<1x128x128xbf16, #tpu.memory_space<vmem>>, vector<1x128x128xbf16>,
    } else {
    }
    %c1_i32 = arith.constant 1 : i32
    %3 = arith.cmpi eq, %arg0, %c1_i32 : i32
    %4 = arith.extui %3 : i1 to i32
    %c0_i32_1 = arith.constant 0 : i32
    %5 = arith.cmpi ne, %4, %c0_i32_1 : i32
    scf.if %5 {
      %c0 = arith.constant 0 : index
      %c0_2 = arith.constant 0 : index
      %6 = vector.load %arg8[%c0, %c0_2] : memref<1x128xf32, #tpu.memory_space<vmem>>, vector<1x128xf32>
      %cst = arith.constant 7.812500e-03 : f32
      %7 = vector.broadcast %cst : f32 to vector<1x128xf32>
      %8 = arith.mulf %6, %7 : vector<1x128xf32>
      %c0_3 = arith.constant 0 : index
      %c0_4 = arith.constant 0 : index
      %9 = vector.load %arg9[%c0_3, %c0_4] : memref<1x128xf32, #tpu.memory_space<vmem>>, vector<1x128xf32>
      %cst_5 = arith.constant 7.812500e-03 : f32
      %10 = vector.broadcast %cst_5 : f32 to vector<1x128xf32>
      %11 = arith.mulf %9, %10 : vector<1x128xf32>
      %12 = arith.mulf %8, %8 : vector<1x128xf32>
      %13 = arith.subf %11, %12 : vector<1x128xf32>
      %cst_6 = arith.constant 0.000000e+00 : f32
      %14 = vector.broadcast %cst_6 : f32 to vector<1x128xf32>
      %15 = arith.maximumf %13, %14 : vector<1x128xf32>
      %c0_7 = arith.constant 0 : index
      %c0_8 = arith.constant 0 : index
      %16 = vector.load %arg4[%c0_7, %c0_8] : memref<1x128xf32, #tpu.memory_space<vmem>>, vector<1x128xf32>
      %cst_9 = arith.constant 9.99999974E-6 : f32
      %17 = vector.broadcast %cst_9 : f32 to vector<1x128xf32>
      %18 = arith.addf %15, %17 : vector<1x128xf32>
      %19 = math.rsqrt %18 : vector<1x128xf32>
      %20 = arith.mulf %16, %19 : vector<1x128xf32>
      %c0_10 = arith.constant 0 : index
      %c0_11 = arith.constant 0 : index
      %21 = vector.load %arg5[%c0_10, %c0_11] : memref<1x128xf32, #tpu.memory_space<vmem>>, vector<1x128xf32>
      %22 = arith.mulf %8, %20 : vector<1x128xf32>
      %23 = arith.subf %21, %22 : vector<1x128xf32>
      %24 = arith.index_cast %arg1 : i32 to index
      %c0_12 = arith.constant 0 : index
      %c0_13 = arith.constant 0 : index
      %25 = vector.load %arg7[%24, %c0_12, %c0_13] : memref<1x128x128xbf16, #tpu.memory_space<vmem>>, vector<1x128x128xbf16>
      %26 = vector.shape_cast %25 : vector<1x128x128xbf16> to vector<128x128xbf16>
      %27 = arith.extf %26 : vector<128x128xbf16> to vector<128x128xf32>
      %28 = vector.broadcast %20 : vector<1x128xf32> to vector<128x128xf32>
      %29 = arith.mulf %27, %28 : vector<128x128xf32>
      %30 = vector.broadcast %23 : vector<1x128xf32> to vector<128x128xf32>
      %31 = arith.addf %29, %30 : vector<128x128xf32>
      %cst_14 = arith.constant 0.000000e+00 : f32
      %32 = vector.broadcast %cst_14 : f32 to vector<128x128xf32>
      %33 = arith.cmpf oge, %31, %32 : vector<128x128xf32>
      %cst_15 = arith.constant 2.000000e-01 : f32
      %34 = vector.broadcast %cst_15 : f32 to vector<128x128xf32>
      %35 = arith.mulf %34, %31 : vector<128x128xf32>
      %36 = arith.select %33, %31, %35 : vector<128x128xi1>, vector<128x128xf32>
      %c0_16 = arith.constant 0 : index
      %c0_17 = arith.constant 0 : index
      %37 = vector.load %arg6[%c0_16, %c0_17] : memref<128x128xf32, #tpu.memory_space<vmem>>, vector<128x128xf32>
      tpu.vector_store %arg6[%c0_16, %c0_17], %36 {strides = array<i32>} : memref<128x128xf32, #tpu.memory_space<vmem>>, vector<128x128xf32>,
    } else {
    }
    return
  }
  func.func @transform_0(%arg0: i32, %arg1: i32) -> (i32, i32) {
    %c0_i32 = arith.constant 0 : i32
    %0 = arith.subi %c0_i32, %arg1 : i32
    %1 = arith.muli %arg0, %0 : i32
    %2 = arith.addi %arg1, %1 : i32
    %c0_i32_0 = arith.constant 0 : i32
    %c0_i32_1 = arith.constant 0 : i32
    return %2, %c0_i32_0 : i32, i32
  }
  func.func @transform_1(%arg0: i32, %arg1: i32) -> (i32, i32) {
    %c0_i32 = arith.constant 0 : i32
    %c0_i32_0 = arith.constant 0 : i32
    %c0_i32_1 = arith.constant 0 : i32
    return %c0_i32, %c0_i32_0 : i32, i32
  }
  func.func @transform_2(%arg0: i32, %arg1: i32) -> (i32, i32) {
    %c0_i32 = arith.constant 0 : i32
    %c0_i32_0 = arith.constant 0 : i32
    %c0_i32_1 = arith.constant 0 : i32
    return %c0_i32, %c0_i32_0 : i32, i32
  }
  func.func @transform_3(%arg0: i32, %arg1: i32) -> (i32, i32) {
    %c0_i32 = arith.constant 0 : i32
    %c0_i32_0 = arith.constant 0 : i32
    %c0_i32_1 = arith.constant 0 : i32
    return %c0_i32, %c0_i32_0 : i32, i32
  }
  func.func @transform_4(%arg0: i32, %arg1: i32) -> (i32, i32) {
    %0 = arith.muli %arg1, %arg0 : i32
    %c0_i32 = arith.constant 0 : i32
    %c0_i32_0 = arith.constant 0 : i32
    return %0, %c0_i32 : i32, i32
  }
}

</mosaic_0001>

<llo_original>
// kernel: dcgan_conv_forward.1
$region0: #{dcgan_conv_forward.1}
  #allocation0 [shape = 'u32[]', space=smem, size = 0x4, offset = 0x4, fixed_abs, tag = 'smem constant byte address 0x4 - core index']
  #allocation1 [shape = 'u32[72,128]{1,0:T(1,128)}', space=vmem, size = 0x9000, scoped, tag = 'internal scratch']
  #allocation2 [shape = 'bf16[1,128,128]{2,1,0:T(8,128)(2,1)}', space=vmem, size = 0x8000, scoped, tag = 'scratch operand']
  #allocation3 [shape = 'f32[1,128]{1,0:T(1,128)}', space=vmem, size = 0x200, scoped, tag = 'scratch operand']
  #allocation4 [shape = 'f32[1,128]{1,0:T(1,128)}', space=vmem, size = 0x200, scoped, tag = 'scratch operand']
  %s0 = inlined_call_operand.vmem [shape: bf16[128,64], index: 0, kind: input, shape index: {}]
  %s1 = inlined_call_operand.vmem [shape: bf16[64,128], index: 1, kind: input, shape index: {}]
  %s2 = inlined_call_operand.vmem [shape: f32[1,128], index: 2, kind: input, shape index: {}]
  %s3 = inlined_call_operand.vmem [shape: f32[1,128], index: 3, kind: input, shape index: {}]
  %s4 = inlined_call_operand.vmem [shape: f32[128,128], index: 4, kind: output, shape index: {}]
  %s5 = sld [smem:[#allocation0]]
  $region61: #{dcgan_conv_forward.1} parent=0
    _
  %s7 = ssub.s32 1, %s5
  %s8 = scalar_select 0, %s7, %s5
  loop: start=0, step=1, limit=4
  $region2: #{dcgan_conv_forward.1} parent=0 // loop_pre_header
    _
  $region3: #{dcgan_conv_forward.1} parent=0 // loop_header
    %s10 = sphi 0, %s14
    %p11 = scmp.ge.s32.totalorder %s10, 4
    %s17 = sphi 0, %s29
    %s18 = sphi 0, %s25
    %s19 = sphi 0, %s17
    %s20 = sphi 0, %s18
    %s21 = sphi 0, %s19
    %s22 = sphi 0, %s20
    %s38 = sphi 0, %s40
    %s41 = sphi 0, %s38
    %s42 = sphi 0, %s41
    %s58 = sphi 0, %s42
    %s62 = sphi 0, %s62
    %s64 = sphi 0, %s62
    %s65 = sphi 0, %s64
    %s79 = sphi 0, %s65
    %s83 = sphi 0, %s83
    %s85 = sphi 0, %s83
    %s86 = sphi 0, %s85
    %s100 = sphi 0, %s86
    %s104 = sphi 0, %s104
    %s106 = sphi 0, %s104
    %s107 = sphi 0, %s106
    %s121 = sphi 0, %s107
    %s129 = sphi 0, %s131
    %s132 = sphi 0, %s129
    %s133 = sphi 0, %s132
    %s149 = sphi 0, %s133
  $region4: #{dcgan_conv_forward.1} parent=0 // loop_header_branch
    %13 = sbr.rel (%p11) target = $region8
  $region5: #{dcgan_conv_forward.1} parent=0 // loop_body
    %s15 = ssub.s32 %s10, 1
    %s16 = ssub.s32 %s10, 2
    %s23 = sadd.s32 1, %s18
    %p24 = scmp.ge.s32.totalorder %s23, 1
    %s25 = scalar_select %p24, 0, %s23
    %s26 = sadd.s32 1, %s17
    %s27 = scalar_select %p24, %s26, %s17
    %p28 = scmp.ge.s32.totalorder %s27, 2
    %s29 = scalar_select %p28, 0, %s27
    %s30 = ssub.s32 0, %s18
    %s31 = smul.u32 %s17, %s30
    %s32 = sadd.s32 %s18, %s31
    %s33 = ssub.s32 0, %s25
    %s34 = smul.u32 %s29, %s33
    %s35 = sadd.s32 %s25, %s34
    %s36 = ssub.s32 %s32, %s35
    %p37 = scmp.eq.s32.totalorder %s36, 0
    %s39 = sadd.s32 %s38, 1
    %s40 = scalar_select %p37, %s38, %s39
    %p43 = pneg %p37
    %p44 = scmp.eq.s32.totalorder %s10, 1
    %p45 = por %p43, %p44
    %p46 = scmp.ne.s32.totalorder %s38, %s41
    %p47 = scmp.eq.s32.totalorder %s10, 0
    %p48 = por %p46, %p47
    %p49 = scmp.ne.s32.totalorder %s38, %s41
    %p50 = scmp.eq.s32.totalorder %s15, 1
    %p51 = por %p49, %p50
    %p52 = scmp.ne.s32.totalorder %s41, %s42
    %p53 = scmp.eq.s32.totalorder %s15, 0
    %p54 = por %p52, %p53
    %p55 = scmp.ne.s32.totalorder %s41, %s42
    %p56 = scmp.eq.s32.totalorder %s16, 1
    %p57 = por %p55, %p56
    %p59 = scmp.ne.s32.totalorder %s42, %s58
    %p60 = scmp.eq.s32.totalorder %s16, 0
    %p61 = por %p59, %p60
    %s63 = sadd.s32 %s62, 1
    %p66 = scmp.eq.s32.totalorder %s10, 1
    %p67 = scmp.ne.s32.totalorder %s62, %s64
    %p68 = scmp.eq.s32.totalorder %s10, 0
    %p69 = por %p67, %p68
    %p70 = scmp.ne.s32.totalorder %s62, %s64
    %p71 = scmp.eq.s32.totalorder %s15, 1
    %p72 = por %p70, %p71
    %p73 = scmp.ne.s32.totalorder %s64, %s65
    %p74 = scmp.eq.s32.totalorder %s15, 0
    %p75 = por %p73, %p74
    %p76 = scmp.ne.s32.totalorder %s64, %s65
    %p77 = scmp.eq.s32.totalorder %s16, 1
    %p78 = por %p76, %p77
    %p80 = scmp.ne.s32.totalorder %s65, %s79
    %p81 = scmp.eq.s32.totalorder %s16, 0
    %p82 = por %p80, %p81
    %s84 = sadd.s32 %s83, 1
    %p87 = scmp.eq.s32.totalorder %s10, 1
    %p88 = scmp.ne.s32.totalorder %s83, %s85
    %p89 = scmp.eq.s32.totalorder %s10, 0
    %p90 = por %p88, %p89
    %p91 = scmp.ne.s32.totalorder %s83, %s85
    %p92 = scmp.eq.s32.totalorder %s15, 1
    %p93 = por %p91, %p92
    %p94 = scmp.ne.s32.totalorder %s85, %s86
    %p95 = scmp.eq.s32.totalorder %s15, 0
    %p96 = por %p94, %p95
    %p97 = scmp.ne.s32.totalorder %s85, %s86
    %p98 = scmp.eq.s32.totalorder %s16, 1
    %p99 = por %p97, %p98
    %p101 = scmp.ne.s32.totalorder %s86, %s100
    %p102 = scmp.eq.s32.totalorder %s16, 0
    %p103 = por %p101, %p102
    %s105 = sadd.s32 %s104, 1
    %p108 = scmp.eq.s32.totalorder %s10, 1
    %p109 = scmp.ne.s32.totalorder %s104, %s106
    %p110 = scmp.eq.s32.totalorder %s10, 0
    %p111 = por %p109, %p110
    %p112 = scmp.ne.s32.totalorder %s104, %s106
    %p113 = scmp.eq.s32.totalorder %s15, 1
    %p114 = por %p112, %p113
    %p115 = scmp.ne.s32.totalorder %s106, %s107
    %p116 = scmp.eq.s32.totalorder %s15, 0
    %p117 = por %p115, %p116
    %p118 = scmp.ne.s32.totalorder %s106, %s107
    %p119 = scmp.eq.s32.totalorder %s16, 1
    %p120 = por %p118, %p119
    %p122 = scmp.ne.s32.totalorder %s107, %s121
    %p123 = scmp.eq.s32.totalorder %s16, 0
    %p124 = por %p122, %p123
    %s125 = smul.u32 %s18, %s17
    %s126 = smul.u32 %s25, %s29
    %s127 = ssub.s32 %s125, %s126
    %p128 = scmp.eq.s32.totalorder %s127, 0
    %s130 = sadd.s32 %s129, 1
    %s131 = scalar_select %p128, %s129, %s130
    %p134 = pneg %p128
    %p135 = scmp.eq.s32.totalorder %s10, 1
    %p136 = por %p134, %p135
    %p137 = scmp.ne.s32.totalorder %s129, %s132
    %p138 = scmp.eq.s32.totalorder %s10, 0
    %p139 = por %p137, %p138
    %p140 = scmp.ne.s32.totalorder %s129, %s132
    %p141 = scmp.eq.s32.totalorder %s15, 1
    %p142 = por %p140, %p141
    %p143 = scmp.ne.s32.totalorder %s132, %s133
    %p144 = scmp.eq.s32.totalorder %s15, 0
    %p145 = por %p143, %p144
    %p146 = scmp.ne.s32.totalorder %s132, %s133
    %p147 = scmp.eq.s32.totalorder %s16, 1
    %p148 = por %p146, %p147
    %p150 = scmp.ne.s32.totalorder %s133, %s149
    %p151 = scmp.eq.s32.totalorder %s16, 0
    %p152 = por %p150, %p151
    %p153 = scmp.le.s32.totalorder 1, %s10
    %p154 = scmp.lt.s32.totalorder %s10, 3
    %p155 = pnand %p153, %p154
    %p156 = pneg %p155
    // Predicated region
    $region9: #{dcgan_conv_forward.1} parent=5 // pred_check
      _
    $region10: #{dcgan_conv_forward.1} parent=5 // pred_check_branch
      %158 = sbr.rel (%p155) target = $region12
    $region11: #{dcgan_conv_forward.1} parent=5 // pred_region
      %s159 = ssub.s32 %s10, 1
      // Predicated region
      $region13: #{dcgan_conv_forward.1} parent=11 // pred_check
        %p160 = pneg %p75
      $region14: #{dcgan_conv_forward.1} parent=11 // pred_check_branch
        %162 = sbr.rel (%p160) target = $region16
      $region15: #{dcgan_conv_forward.1} parent=11 // pred_region
        _
      $region16: #{dcgan_conv_forward.1} parent=11 // pred_fallthru
        _
      // Predicated region
      $region17: #{dcgan_conv_forward.1} parent=11 // pred_check
        %p163 = pneg %p96
      $region18: #{dcgan_conv_forward.1} parent=11 // pred_check_branch
        %165 = sbr.rel (%p163) target = $region20
      $region19: #{dcgan_conv_forward.1} parent=11 // pred_region
        _
      $region20: #{dcgan_conv_forward.1} parent=11 // pred_fallthru
        _
      // Predicated region
      $region21: #{dcgan_conv_forward.1} parent=11 // pred_check
        %p166 = pneg %p117
      $region22: #{dcgan_conv_forward.1} parent=11 // pred_check_branch
        %168 = sbr.rel (%p166) target = $region24
      $region23: #{dcgan_conv_forward.1} parent=11 // pred_region
        _
      $region24: #{dcgan_conv_forward.1} parent=11 // pred_fallthru
        _
    $region12: #{dcgan_conv_forward.1} parent=5 // pred_fallthru
      _
    %p169 = scmp.lt.s32.totalorder %s10, 2
    // Predicated region
    $region25: #{dcgan_conv_forward.1} parent=5 // pred_check
      %p170 = pneg %p169
    $region26: #{dcgan_conv_forward.1} parent=5 // pred_check_branch
      %172 = sbr.rel (%p170) target = $region28
    $region27: #{dcgan_conv_forward.1} parent=5 // pred_region
      // Predicated region
      $region29: #{dcgan_conv_forward.1} parent=27 // pred_check
        %p173 = pneg %p48
      $region30: #{dcgan_conv_forward.1} parent=27 // pred_check_branch
        %175 = sbr.rel (%p173) target = $region32
      $region31: #{dcgan_conv_forward.1} parent=27 // pred_region
        %s176 = ssub.s32 0, %s18
        %s177 = smul.u32 %s17, %s176
        %s178 = sadd.s32 %s18, %s177
        %s179 = smul.u32 16, %s178
        %p180 = scmp.lt.s32.totalorder %s179, 15
        %s181 = scalar_select %p180, %s179, 15
        %s182 = smul.addr %s181, 4
        %s183 = scalar_lea.vmem %s0, %s182
        %s184 = ssub.s32 0, %s18
        %s185 = smul.u32 %s17, %s184
        %s186 = sadd.s32 %s18, %s185
        %s187 = smul.u32 16, %s186
      $region32: #{dcgan_conv_forward.1} parent=27 // pred_fallthru
        _
    $region28: #{dcgan_conv_forward.1} parent=5 // pred_fallthru
      _
    %p188 = scmp.le.s32.totalorder 1, %s10
    %p189 = scmp.lt.s32.totalorder %s10, 3
    %p190 = pnand %p188, %p189
    %p191 = pneg %p190
    // Predicated region
    $region33: #{dcgan_conv_forward.1} parent=5 // pred_check
      _
    $region34: #{dcgan_conv_forward.1} parent=5 // pred_check_branch
      %193 = sbr.rel (%p190) target = $region36
    $region35: #{dcgan_conv_forward.1} parent=5 // pred_region
      %s194 = ssub.s32 %s10, 1
      %s195 = ssub.s32 0, %s20
      %s196 = smul.u32 %s19, %s195
      %s197 = sadd.s32 %s20, %s196
      %s198 = smul.u32 16, %s197
      %p199 = scmp.lt.s32.totalorder %s198, 15
      %s200 = scalar_select %p199, %s198, 15
      %s201 = smul.addr %s200, 4
      %s202 = scalar_lea.vmem %s0, %s201
      %p203 = pneg %p54
      %p204 = pneg %p51
      %p205 = pneg %p75
      %p206 = pneg %p72
      %p207 = pneg %p96
      %p208 = pneg %p93
      %p209 = pneg %p117
      %p210 = pneg %p114
      %p211 = pneg %p145
      %p212 = pneg %p142
      %s213 = smul.u32 %s20, %s19
      %s214 = smul.u32 16, %s213
      %p215 = scmp.lt.s32.totalorder %s214, 15
      %s216 = scalar_select %p215, %s214, 15
      %s217 = smul.addr %s216, 8
      %s218 = scalar_lea.vmem %s4, %s217
      %s219 = ssub.s32 0, %s20
      %s220 = smul.u32 %s19, %s219
      %s221 = sadd.s32 %s20, %s220
      %s222 = smul.u32 16, %s221
      %p223 = scmp.lt.s32.totalorder %s222, 15
      %s224 = scalar_select %p223, %s222, 15
      %s225 = smul.addr %s224, 4
      %s226 = scalar_lea.vmem %s0, %s225
      %s227 = ssub.s32 0, %s20
      %s228 = smul.u32 %s19, %s227
      %s229 = sadd.s32 %s20, %s228
      %s230 = smul.u32 16, %s229
      %s231 = smul.u32 %s20, %s19
      %s232 = smul.u32 16, %s231
      %p233 = scmp.lt.s32.totalorder %s232, 15
      %s234 = scalar_select %p233, %s232, 15
      %s235 = smul.addr %s234, 8
      %s236 = scalar_lea.vmem %s4, %s235
      %s237 = smul.u32 %s20, %s19
      %s238 = smul.u32 16, %s237
      %p240 = scmp.eq.s32.totalorder %s19, 0
      // Predicated region
      $region37: #{dcgan_conv_forward.1} parent=35 // pred_check
        %p241 = pneg %p240
      $region38: #{dcgan_conv_forward.1} parent=35 // pred_check_branch
        %243 = sbr.rel (%p241) target = $region40
      $region39: #{dcgan_conv_forward.1} parent=35 // pred_region
        %p244 = scmp.eq.s32.totalorder %s20, 0
        // Predicated region
        $region41: #{dcgan_conv_forward.1} parent=39 // pred_check
          %p245 = pneg %p244
        $region42: #{dcgan_conv_forward.1} parent=39 // pred_check_branch
          %247 = sbr.rel (%p245) target = $region44
        $region43: #{dcgan_conv_forward.1} parent=39 // pred_region
          %248 = vst [vmem:[#allocation3] sm:$0x1] 0.0
          %249 = vst [vmem:[#allocation4] sm:$0x1] 0.0
        $region44: #{dcgan_conv_forward.1} parent=39 // pred_fallthru
          _
        %v250 = vld [vmem:[%s226] sm:$0xf]
        %v251 = vld [vmem:[%s226 + $0x4] sm:$0xf]
        %v252 = vld [vmem:[%s226 + $0x8] sm:$0xf]
        %v253 = vld [vmem:[%s226 + $0xc] sm:$0xf]
        %v254 = vld [vmem:[%s226 + $0x10] sm:$0xf]
        %v255 = vld [vmem:[%s226 + $0x14] sm:$0xf]
        %v256 = vld [vmem:[%s226 + $0x18] sm:$0xf]
        %v257 = vld [vmem:[%s226 + $0x1c] sm:$0xf]
        %v258 = vld [vmem:[%s226 + $0x20] sm:$0xf]
        %v259 = vld [vmem:[%s226 + $0x24] sm:$0xf]
        %v260 = vld [vmem:[%s226 + $0x28] sm:$0xf]
        %v261 = vld [vmem:[%s226 + $0x2c] sm:$0xf]
        %v262 = vld [vmem:[%s226 + $0x30] sm:$0xf]
        %v263 = vld [vmem:[%s226 + $0x34] sm:$0xf]
        %v264 = vld [vmem:[%s226 + $0x38] sm:$0xf]
        %v265 = vld [vmem:[%s226 + $0x3c] sm:$0xf]
        %v266 = vld [vmem:[%s1] sm:$0xf]
        %v267 = vld [vmem:[%s1 + $0x4] sm:$0xf]
        %v268 = vld [vmem:[%s1 + $0x8] sm:$0xf]
        %v269 = vld [vmem:[%s1 + $0xc] sm:$0xf]
        %v270 = vld [vmem:[%s1 + $0x10] sm:$0xf]
        %v271 = vld [vmem:[%s1 + $0x14] sm:$0xf]
        %v272 = vld [vmem:[%s1 + $0x18] sm:$0xf]
        %v273 = vld [vmem:[%s1 + $0x1c] sm:$0xf]
        %v290 = vunpack.c.l.b16 %v250
        %v291 = vunpack.c.l.b16 %v251
        %v292 = vunpack.c.l.b16 %v252
        %v293 = vunpack.c.l.b16 %v253
        %v294 = vunpack.c.l.b16 %v254
        %v295 = vunpack.c.l.b16 %v255
        %v296 = vunpack.c.l.b16 %v256
        %v297 = vunpack.c.l.b16 %v257
        %v298 = vunpack.c.l.b16 %v258
        %v299 = vunpack.c.l.b16 %v259
        %v300 = vunpack.c.l.b16 %v260
        %v301 = vunpack.c.l.b16 %v261
        %v302 = vunpack.c.l.b16 %v262
        %v303 = vunpack.c.l.b16 %v263
        %v304 = vunpack.c.l.b16 %v264
        %v305 = vunpack.c.l.b16 %v265
        %v306 = vpack.c.b16 %v291, %v290
        %v307 = vpack.c.b16 %v293, %v292
        %v308 = vpack.c.b16 %v295, %v294
        %v309 = vpack.c.b16 %v297, %v296
        %v310 = vpack.c.b16 %v299, %v298
        %v311 = vpack.c.b16 %v301, %v300
        %v312 = vpack.c.b16 %v303, %v302
        %v313 = vpack.c.b16 %v305, %v304
        %v322 = vunpack.c.l.b16 %v266
        %v323 = vunpack.c.l.b16 %v267
        %v324 = vunpack.c.l.b16 %v268
        %v325 = vunpack.c.l.b16 %v269
        %v326 = vunpack.c.l.b16 %v270
        %v327 = vunpack.c.l.b16 %v271
        %v328 = vunpack.c.l.b16 %v272
        %v329 = vunpack.c.l.b16 %v273
        %v330 = vpack.c.b16 %v323, %v322
        %v331 = vpack.c.b16 %v325, %v324
        %v332 = vpack.c.b16 %v327, %v326
        %v333 = vpack.c.b16 %v329, %v328
        %vm338 = vcmask 523264
        %v340 = vsel %vm338, %v306, 0
        %v343 = vsel %vm338, %v307, 0
        %v346 = vsel %vm338, %v308, 0
        %v349 = vsel %vm338, %v309, 0
        %v352 = vsel %vm338, %v310, 0
        %v355 = vsel %vm338, %v311, 0
        %v358 = vsel %vm338, %v312, 0
        %v361 = vsel %vm338, %v313, 0
        %363 = vmatpush.bf16.msra.mxu0 0
        %364 = vmatpush.bf16.msra.mxu0 0
        %365 = vmatpush.bf16.msra.mxu0 0
        %366 = vmatpush.bf16.msra.mxu0 0
        %367 = vmatpush.bf16.msra.mxu0 %v333
        %368 = vmatpush.bf16.msra.mxu0 %v332
        %369 = vmatpush.bf16.msra.mxu0 %v331
        %370 = vmatpush.bf16.msra.mxu0 %v330
        %371 = vmatmul.bf16.gmra.mxu0 %v340
        %v372 = vpop.f32.mrf.mxu0
        %v373 = vadd.f32 0.0, %v372
        %v374 = vpop.f32.mrf.mxu0
        %v375 = vadd.f32 0.0, %v374
        %376 = vmatmul.bf16.gmra.mxu0 %v343
        %v377 = vpop.f32.mrf.mxu0
        %v378 = vadd.f32 0.0, %v377
        %v379 = vpop.f32.mrf.mxu0
        %v380 = vadd.f32 0.0, %v379
        %381 = vmatmul.bf16.gmra.mxu0 %v346
        %v382 = vpop.f32.mrf.mxu0
        %v383 = vadd.f32 0.0, %v382
        %v384 = vpop.f32.mrf.mxu0
        %v385 = vadd.f32 0.0, %v384
        %386 = vmatmul.bf16.gmra.mxu0 %v349
        %v387 = vpop.f32.mrf.mxu0
        %v388 = vadd.f32 0.0, %v387
        %v389 = vpop.f32.mrf.mxu0
        %v390 = vadd.f32 0.0, %v389
        %391 = vmatmul.bf16.gmra.mxu0 %v352
        %v392 = vpop.f32.mrf.mxu0
        %v393 = vadd.f32 0.0, %v392
        %v394 = vpop.f32.mrf.mxu0
        %v395 = vadd.f32 0.0, %v394
        %396 = vmatmul.bf16.gmra.mxu0 %v355
        %v397 = vpop.f32.mrf.mxu0
        %v398 = vadd.f32 0.0, %v397
        %v399 = vpop.f32.mrf.mxu0
        %v400 = vadd.f32 0.0, %v399
        %401 = vmatmul.bf16.gmra.mxu0 %v358
        %v402 = vpop.f32.mrf.mxu0
        %v403 = vadd.f32 0.0, %v402
        %v404 = vpop.f32.mrf.mxu0
        %v405 = vadd.f32 0.0, %v404
        %406 = vmatmul.bf16.gmra.mxu0 %v361
        %v407 = vpop.f32.mrf.mxu0
        %v408 = vadd.f32 0.0, %v407
        %v409 = vpop.f32.mrf.mxu0
        %v410 = vadd.f32 0.0, %v409
        %411 = vdwg.mxu0
        %v412 = vld [vmem:[#allocation3] sm:$0x1]
        %v413 = vadd.f32 %v373, %v375
        %v414 = vadd.f32 %v413, %v378
        %v415 = vadd.f32 %v414, %v380
        %v416 = vadd.f32 %v415, %v383
        %v417 = vadd.f32 %v416, %v385
        %v418 = vadd.f32 %v417, %v388
        %v419 = vadd.f32 %v418, %v390
        %v420 = vadd.f32 %v419, %v393
        %v421 = vadd.f32 %v420, %v395
        %v422 = vadd.f32 %v421, %v398
        %v423 = vadd.f32 %v422, %v400
        %v424 = vadd.f32 %v423, %v403
        %v425 = vadd.f32 %v424, %v405
        %v426 = vadd.f32 %v425, %v408
        %v427 = vadd.f32 %v426, %v410
        %v428 = vrot.slane %v427, 4
        %v429 = vadd.f32 %v427, %v428
        %v430 = vrot.slane %v429, 2
        %v431 = vadd.f32 %v429, %v430
        %v432 = vrot.slane %v431, 1
        %v433 = vadd.f32 %v431, %v432
        %v434 = vadd.f32 %v412, %v433
        %435 = vst [vmem:[#allocation3] sm:$0x1] %v434
        %v436 = vld [vmem:[#allocation4] sm:$0x1]
        %v437 = vmul.f32 %v373, %v373
        %v438 = vmul.f32 %v375, %v375
        %v439 = vmul.f32 %v378, %v378
        %v440 = vmul.f32 %v380, %v380
        %v441 = vmul.f32 %v383, %v383
        %v442 = vmul.f32 %v385, %v385
        %v443 = vmul.f32 %v388, %v388
        %v444 = vmul.f32 %v390, %v390
        %v445 = vmul.f32 %v393, %v393
        %v446 = vmul.f32 %v395, %v395
        %v447 = vmul.f32 %v398, %v398
        %v448 = vmul.f32 %v400, %v400
        %v449 = vmul.f32 %v403, %v403
        %v450 = vmul.f32 %v405, %v405
        %v451 = vmul.f32 %v408, %v408
        %v452 = vmul.f32 %v410, %v410
        %v453 = vadd.f32 %v437, %v438
        %v454 = vadd.f32 %v453, %v439
        %v455 = vadd.f32 %v454, %v440
        %v456 = vadd.f32 %v455, %v441
        %v457 = vadd.f32 %v456, %v442
        %v458 = vadd.f32 %v457, %v443
        %v459 = vadd.f32 %v458, %v444
        %v460 = vadd.f32 %v459, %v445
        %v461 = vadd.f32 %v460, %v446
        %v462 = vadd.f32 %v461, %v447
        %v463 = vadd.f32 %v462, %v448
        %v464 = vadd.f32 %v463, %v449
        %v465 = vadd.f32 %v464, %v450
        %v466 = vadd.f32 %v465, %v451
        %v467 = vadd.f32 %v466, %v452
        %v468 = vrot.slane %v467, 4
        %v469 = vadd.f32 %v467, %v468
        %v470 = vrot.slane %v469, 2
        %v471 = vadd.f32 %v469, %v470
        %v472 = vrot.slane %v471, 1
        %v473 = vadd.f32 %v471, %v472
        %v474 = vadd.f32 %v436, %v473
        %475 = vst [vmem:[#allocation4] sm:$0x1] %v474
        %v476 = vpack.c.bf16 %v373, %v373
        %v477 = vpack.c.bf16 %v375, %v375
        %v478 = vpack.c.bf16 %v378, %v378
        %v479 = vpack.c.bf16 %v380, %v380
        %v480 = vpack.c.bf16 %v383, %v383
        %v481 = vpack.c.bf16 %v385, %v385
        %v482 = vpack.c.bf16 %v388, %v388
        %v483 = vpack.c.bf16 %v390, %v390
        %v484 = vpack.c.bf16 %v393, %v393
        %v485 = vpack.c.bf16 %v395, %v395
        %v486 = vpack.c.bf16 %v398, %v398
        %v487 = vpack.c.bf16 %v400, %v400
        %v488 = vpack.c.bf16 %v403, %v403
        %v489 = vpack.c.bf16 %v405, %v405
        %v490 = vpack.c.bf16 %v408, %v408
        %v491 = vpack.c.bf16 %v410, %v410
        %s492 = smul.u32 %s20, 16
        %s493 = smul.addr %s492, 4
        %s494 = scalar_lea.vmem [#allocation2], %s493
        %495 = vst [vmem:[%s494] sm:$0xf] %v476
        %496 = vst [vmem:[%s494 + $0x4] sm:$0xf] %v477
        %497 = vst [vmem:[%s494 + $0x8] sm:$0xf] %v478
        %498 = vst [vmem:[%s494 + $0xc] sm:$0xf] %v479
        %499 = vst [vmem:[%s494 + $0x10] sm:$0xf] %v480
        %500 = vst [vmem:[%s494 + $0x14] sm:$0xf] %v481
        %501 = vst [vmem:[%s494 + $0x18] sm:$0xf] %v482
        %502 = vst [vmem:[%s494 + $0x1c] sm:$0xf] %v483
        %503 = vst [vmem:[%s494 + $0x20] sm:$0xf] %v484
        %504 = vst [vmem:[%s494 + $0x24] sm:$0xf] %v485
        %505 = vst [vmem:[%s494 + $0x28] sm:$0xf] %v486
        %506 = vst [vmem:[%s494 + $0x2c] sm:$0xf] %v487
        %507 = vst [vmem:[%s494 + $0x30] sm:$0xf] %v488
        %508 = vst [vmem:[%s494 + $0x34] sm:$0xf] %v489
        %509 = vst [vmem:[%s494 + $0x38] sm:$0xf] %v490
        %510 = vst [vmem:[%s494 + $0x3c] sm:$0xf] %v491
      $region40: #{dcgan_conv_forward.1} parent=35 // pred_fallthru
        _
      %p511 = scmp.eq.s32.totalorder %s19, 1
      // Predicated region
      $region45: #{dcgan_conv_forward.1} parent=35 // pred_check
        %p512 = pneg %p511
      $region46: #{dcgan_conv_forward.1} parent=35 // pred_check_branch
        %514 = sbr.rel (%p512) target = $region48
      $region47: #{dcgan_conv_forward.1} parent=35 // pred_region
        %v515 = vld [vmem:[#allocation3] sm:$0x1]
        %v516 = vmul.f32 %v515, 0.0078125
        %v517 = vld [vmem:[#allocation4] sm:$0x1]
        %v518 = vmul.f32 %v517, 0.0078125
        %v519 = vmul.f32 %v516, %v516
        %v520 = vsub.f32 %v518, %v519
        %v521 = vmax.f32 %v520, 0.0
        %v522 = vld [vmem:[%s2] sm:$0x1]
        %v523 = vadd.f32 %v521, 1e-05
        %v524 = vrsqrt.pop %v523
        %v525 = vmul.f32 %v524, %v523
        %v526 = vmul.f32 %v525, %v524
        %v527 = vmul.f32 0.5, %v526
        %v528 = vsub.f32 1.5, %v527
        %v529 = vmul.f32 %v524, %v528
        %vm530 = vweird.f32 %v523
        %vm531 = vweird.f32 %v524
        %vm532 = vmor %vm530, %vm531
        %v533 = vsel %vm532, %v524, %v529
        %v534 = vmul.f32 %v522, %v533
        %v535 = vld [vmem:[%s3] sm:$0x1]
        %v536 = vmul.f32 %v516, %v534
        %v537 = vsub.f32 %v535, %v536
        %s538 = smul.u32 %s20, 16
        %s539 = smul.addr %s538, 4
        %s540 = scalar_lea.vmem [#allocation2], %s539
        %v541 = vld [vmem:[%s540] sm:$0xf]
        %v542 = vld [vmem:[%s540 + $0x4] sm:$0xf]
        %v543 = vld [vmem:[%s540 + $0x8] sm:$0xf]
        %v544 = vld [vmem:[%s540 + $0xc] sm:$0xf]
        %v545 = vld [vmem:[%s540 + $0x10] sm:$0xf]
        %v546 = vld [vmem:[%s540 + $0x14] sm:$0xf]
        %v547 = vld [vmem:[%s540 + $0x18] sm:$0xf]
        %v548 = vld [vmem:[%s540 + $0x1c] sm:$0xf]
        %v549 = vld [vmem:[%s540 + $0x20] sm:$0xf]
        %v550 = vld [vmem:[%s540 + $0x24] sm:$0xf]
        %v551 = vld [vmem:[%s540 + $0x28] sm:$0xf]
        %v552 = vld [vmem:[%s540 + $0x2c] sm:$0xf]
        %v553 = vld [vmem:[%s540 + $0x30] sm:$0xf]
        %v554 = vld [vmem:[%s540 + $0x34] sm:$0xf]
        %v555 = vld [vmem:[%s540 + $0x38] sm:$0xf]
        %v556 = vld [vmem:[%s540 + $0x3c] sm:$0xf]
        %v557 = vunpack.c.l.bf16 %v541
        %v558 = vunpack.c.l.bf16 %v542
        %v559 = vunpack.c.l.bf16 %v543
        %v560 = vunpack.c.l.bf16 %v544
        %v561 = vunpack.c.l.bf16 %v545
        %v562 = vunpack.c.l.bf16 %v546
        %v563 = vunpack.c.l.bf16 %v547
        %v564 = vunpack.c.l.bf16 %v548
        %v565 = vunpack.c.l.bf16 %v549
        %v566 = vunpack.c.l.bf16 %v550
        %v567 = vunpack.c.l.bf16 %v551
        %v568 = vunpack.c.l.bf16 %v552
        %v569 = vunpack.c.l.bf16 %v553
        %v570 = vunpack.c.l.bf16 %v554
        %v571 = vunpack.c.l.bf16 %v555
        %v572 = vunpack.c.l.bf16 %v556
        %v574 = vperm.slane %v534, 0
        %v576 = vmul.f32 %v557, %v574
        %v577 = vmul.f32 %v558, %v574
        %v578 = vmul.f32 %v559, %v574
        %v579 = vmul.f32 %v560, %v574
        %v580 = vmul.f32 %v561, %v574
        %v581 = vmul.f32 %v562, %v574
        %v582 = vmul.f32 %v563, %v574
        %v583 = vmul.f32 %v564, %v574
        %v584 = vmul.f32 %v565, %v574
        %v585 = vmul.f32 %v566, %v574
        %v586 = vmul.f32 %v567, %v574
        %v587 = vmul.f32 %v568, %v574
        %v588 = vmul.f32 %v569, %v574
        %v589 = vmul.f32 %v570, %v574
        %v590 = vmul.f32 %v571, %v574
        %v591 = vmul.f32 %v572, %v574
        %v593 = vperm.slane %v537, 0
        %v595 = vadd.f32 %v576, %v593
        %v596 = vadd.f32 %v577, %v593
        %v597 = vadd.f32 %v578, %v593
        %v598 = vadd.f32 %v579, %v593
        %v599 = vadd.f32 %v580, %v593
        %v600 = vadd.f32 %v581, %v593
        %v601 = vadd.f32 %v582, %v593
        %v602 = vadd.f32 %v583, %v593
        %v603 = vadd.f32 %v584, %v593
        %v604 = vadd.f32 %v585, %v593
        %v605 = vadd.f32 %v586, %v593
        %v606 = vadd.f32 %v587, %v593
        %v607 = vadd.f32 %v588, %v593
        %v608 = vadd.f32 %v589, %v593
        %v609 = vadd.f32 %v590, %v593
        %v610 = vadd.f32 %v591, %v593
        %vm611 = vcmp.ge.f32.partialorder %v595, 0.0
        %vm612 = vcmp.ge.f32.partialorder %v596, 0.0
        %vm613 = vcmp.ge.f32.partialorder %v597, 0.0
        %vm614 = vcmp.ge.f32.partialorder %v598, 0.0
        %vm615 = vcmp.ge.f32.partialorder %v599, 0.0
        %vm616 = vcmp.ge.f32.partialorder %v600, 0.0
        %vm617 = vcmp.ge.f32.partialorder %v601, 0.0
        %vm618 = vcmp.ge.f32.partialorder %v602, 0.0
        %vm619 = vcmp.ge.f32.partialorder %v603, 0.0
        %vm620 = vcmp.ge.f32.partialorder %v604, 0.0
        %vm621 = vcmp.ge.f32.partialorder %v605, 0.0
        %vm622 = vcmp.ge.f32.partialorder %v606, 0.0
        %vm623 = vcmp.ge.f32.partialorder %v607, 0.0
        %vm624 = vcmp.ge.f32.partialorder %v608, 0.0
        %vm625 = vcmp.ge.f32.partialorder %v609, 0.0
        %vm626 = vcmp.ge.f32.partialorder %v610, 0.0
        %v627 = vmul.f32 %v595, 0.2
        %v628 = vmul.f32 %v596, 0.2
        %v629 = vmul.f32 %v597, 0.2
        %v630 = vmul.f32 %v598, 0.2
        %v631 = vmul.f32 %v599, 0.2
        %v632 = vmul.f32 %v600, 0.2
        %v633 = vmul.f32 %v601, 0.2
        %v634 = vmul.f32 %v602, 0.2
        %v635 = vmul.f32 %v603, 0.2
        %v636 = vmul.f32 %v604, 0.2
        %v637 = vmul.f32 %v605, 0.2
        %v638 = vmul.f32 %v606, 0.2
        %v639 = vmul.f32 %v607, 0.2
        %v640 = vmul.f32 %v608, 0.2
        %v641 = vmul.f32 %v609, 0.2
        %v642 = vmul.f32 %v610, 0.2
        %v643 = vsel %vm611, %v595, %v627
        %v644 = vsel %vm612, %v596, %v628
        %v645 = vsel %vm613, %v597, %v629
        %v646 = vsel %vm614, %v598, %v630
        %v647 = vsel %vm615, %v599, %v631
        %v648 = vsel %vm616, %v600, %v632
        %v649 = vsel %vm617, %v601, %v633
        %v650 = vsel %vm618, %v602, %v634
        %v651 = vsel %vm619, %v603, %v635
        %v652 = vsel %vm620, %v604, %v636
        %v653 = vsel %vm621, %v605, %v637
        %v654 = vsel %vm622, %v606, %v638
        %v655 = vsel %vm623, %v607, %v639
        %v656 = vsel %vm624, %v608, %v640
        %v657 = vsel %vm625, %v609, %v641
        %v658 = vsel %vm626, %v610, %v642
        %659 = vst [vmem:[%s236] sm:$0xff] %v643
        %660 = vst [vmem:[%s236 + $0x8] sm:$0xff] %v644
        %661 = vst [vmem:[%s236 + $0x10] sm:$0xff] %v645
        %662 = vst [vmem:[%s236 + $0x18] sm:$0xff] %v646
        %663 = vst [vmem:[%s236 + $0x20] sm:$0xff] %v647
        %664 = vst [vmem:[%s236 + $0x28] sm:$0xff] %v648
        %665 = vst [vmem:[%s236 + $0x30] sm:$0xff] %v649
        %666 = vst [vmem:[%s236 + $0x38] sm:$0xff] %v650
        %667 = vst [vmem:[%s236 + $0x40] sm:$0xff] %v651
        %668 = vst [vmem:[%s236 + $0x48] sm:$0xff] %v652
        %669 = vst [vmem:[%s236 + $0x50] sm:$0xff] %v653
        %670 = vst [vmem:[%s236 + $0x58] sm:$0xff] %v654
        %671 = vst [vmem:[%s236 + $0x60] sm:$0xff] %v655
        %672 = vst [vmem:[%s236 + $0x68] sm:$0xff] %v656
        %673 = vst [vmem:[%s236 + $0x70] sm:$0xff] %v657
        %674 = vst [vmem:[%s236 + $0x78] sm:$0xff] %v658
      $region48: #{dcgan_conv_forward.1} parent=35 // pred_fallthru
        _
      %s675 = smul.u32 %s20, %s19
      %s676 = smul.u32 16, %s675
      %p677 = scmp.lt.s32.totalorder %s676, 15
      %s678 = scalar_select %p677, %s676, 15
      %s679 = smul.addr %s678, 8
      %s680 = scalar_lea.vmem %s4, %s679
      // Predicated region
      $region49: #{dcgan_conv_forward.1} parent=35 // pred_check
        %p681 = pneg %p142
      $region50: #{dcgan_conv_forward.1} parent=35 // pred_check_branch
        %683 = sbr.rel (%p681) target = $region52
      $region51: #{dcgan_conv_forward.1} parent=35 // pred_region
        %s684 = smul.u32 %s20, %s19
        %s685 = smul.u32 16, %s684
      $region52: #{dcgan_conv_forward.1} parent=35 // pred_fallthru
        _
    $region36: #{dcgan_conv_forward.1} parent=5 // pred_fallthru
      _
    %p686 = scmp.le.s32.totalorder 2, %s10
    // Predicated region
    $region53: #{dcgan_conv_forward.1} parent=5 // pred_check
      %p687 = pneg %p686
    $region54: #{dcgan_conv_forward.1} parent=5 // pred_check_branch
      %689 = sbr.rel (%p687) target = $region56
    $region55: #{dcgan_conv_forward.1} parent=5 // pred_region
      %s690 = ssub.s32 %s10, 2
      // Predicated region
      $region57: #{dcgan_conv_forward.1} parent=55 // pred_check
        %p691 = pneg %p148
      $region58: #{dcgan_conv_forward.1} parent=55 // pred_check_branch
        %693 = sbr.rel (%p691) target = $region60
      $region59: #{dcgan_conv_forward.1} parent=55 // pred_region
        %s694 = smul.u32 %s22, %s21
        %s695 = smul.u32 16, %s694
        %p696 = scmp.lt.s32.totalorder %s695, 15
        %s697 = scalar_select %p696, %s695, 15
        %s698 = smul.addr %s697, 8
        %s699 = scalar_lea.vmem %s4, %s698
      $region60: #{dcgan_conv_forward.1} parent=55 // pred_fallthru
        _
    $region56: #{dcgan_conv_forward.1} parent=5 // pred_fallthru
      _
  $region6: #{dcgan_conv_forward.1} parent=0 // loop_footer
    %s14 = sadd.s32 1, %s10
  $region7: #{dcgan_conv_forward.1} parent=0 // loop_footer_branch
    %9 = sbr.rel target = $region3
  $region8: #{dcgan_conv_forward.1} parent=0 // loop_exit
    _

</llo_original>
